<compile_context>
chip_gen: v6e
topology: v6e:2x2x1
jax: 0.10.0
libtpu: 0.0.40
codegen_flags: <defaults>
</compile_context>

<pallas_src>
import jax
import jax.numpy as jnp
from jax.experimental import pallas as pl
from jax.experimental.pallas import tpu as pltpu


def _ntxent_denom_kernel(lhs_i_ref, lhs_j_ref, rhs_i_ref, rhs_j_ref, out_ref):
    # lhs_*: (TR, Dp) row tiles of the scaled+normalized views (bf16 or f32).
    # rhs_*: (Dp, Np) full transposed scaled+normalized views, VMEM resident.
    # out:   (TR, 2) f32 — column 0: rows of view i, column 1: rows of view j.
    xi = lhs_i_ref[...]
    xj = lhs_j_ref[...]

    def rowsum_exp(lhs, rhs_ref):
        # (TR, Dp) @ (Dp, Np) on the MXU, f32 accumulation; exp on the EUP;
        # cross-lane row-sum on the XLU.  Consumed immediately so only ~one
        # (TR, Np) f32 tile is live at a time.
        s = jnp.dot(lhs, rhs_ref[...], preferred_element_type=jnp.float32)
        return jnp.sum(jnp.exp(s), axis=1, keepdims=True)          # (TR, 1)

    d_i = rowsum_exp(xi, rhs_i_ref) + rowsum_exp(xi, rhs_j_ref)
    d_j = rowsum_exp(xj, rhs_i_ref) + rowsum_exp(xj, rhs_j_ref)
    out_ref[...] = jnp.concatenate([d_i, d_j], axis=1)             # (TR, 2)


def _round_up(x, m):
    return ((x + m - 1) // m) * m


def nt_xent_loss_pallas(emb_i, emb_j, temperature=0.5, *, row_tile=256,
                        use_bf16_matmul=True):
    emb_i = jnp.asarray(emb_i, jnp.float32)
    emb_j = jnp.asarray(emb_j, jnp.float32)
    n, d = emb_i.shape
    inv_t = jnp.float32(1.0 / float(temperature))
    scale = jnp.sqrt(inv_t)

    # ---- O(N*D) prep in plain XLA (negligible vs the O(N^2*D) kernel) ------
    def norm_scale(x):
        nr = jnp.sqrt(jnp.sum(x * x, axis=1, keepdims=True))
        # sqrt(1/T) folded in, so raw dot products are already the scaled sims.
        return (x / (nr + 1e-8)) * scale

    xs_i = norm_scale(emb_i)
    xs_j = norm_scale(emb_j)

    # Feature dim -> lane multiple of 128; rows -> multiple of the row tile.
    # Zero padding is loss-neutral up to the analytic correction below.
    dp = max(128, _round_up(d, 128))
    n_tiles = max(1, -(-n // row_tile))                  # cdiv(n, row_tile)
    tr = max(8, _round_up(-(-n // n_tiles), 8))          # balanced, 8-aligned
    np_rows = tr * n_tiles
    pad = ((0, np_rows - n), (0, dp - d))
    xs_i_p = jnp.pad(xs_i, pad)
    xs_j_p = jnp.pad(xs_j, pad)

    mxu_dtype = jnp.bfloat16 if use_bf16_matmul else jnp.float32
    lhs_i = xs_i_p.astype(mxu_dtype)                     # (Np, Dp)
    lhs_j = xs_j_p.astype(mxu_dtype)
    rhs_i_t = lhs_i.T                                    # (Dp, Np) — one-time XLA transpose
    rhs_j_t = lhs_j.T

    # Self / positive-pair similarities from the same (possibly bf16-cast)
    # values the MXU sees, so the diagonal cancellation stays consistent.
    xi_acc = lhs_i.astype(jnp.float32)
    xj_acc = lhs_j.astype(jnp.float32)
    self_i = jnp.sum(xi_acc * xi_acc, axis=1)[:n]
    self_j = jnp.sum(xj_acc * xj_acc, axis=1)[:n]
    pos = jnp.sum(xi_acc * xj_acc, axis=1)[:n]

    # ---- VMEM budget derived from shapes, clamped to device capacity -------
    bpe = 2 if use_bf16_matmul else 4
    vmem_needed = (2 * dp * np_rows * bpe        # resident transposed RHS (x2 views)
                   + 2 * 2 * tr * dp * bpe       # double-buffered LHS row tiles
                   + 2 * tr * np_rows * 4        # live f32 sim/exp tiles
                   + 4 * tr * 2 * 4              # output blocks
                   + (2 << 20))                  # headroom
    try:
        vmem_cap = int(pltpu.get_tpu_info().vmem_capacity_bytes)
    except Exception:
        vmem_cap = 64 << 20                      # conservative (v7x per-TC)
    vmem_limit = int(min(max(vmem_needed, 16 << 20), int(vmem_cap * 0.9)))
    # TODO(synk): add a streamed (column-blocked, Buffered(2-3)) fallback for
    # batches where 2*Np*Dp does not fit VMEM residency (esp. v7x's 64 MiB).

    grid = (np_rows // tr,)
    denoms = pl.pallas_call(
        _ntxent_denom_kernel,
        out_shape=jax.ShapeDtypeStruct((np_rows, 2), jnp.float32),
        grid_spec=pltpu.PrefetchScalarGridSpec(
            num_scalar_prefetch=0,
            grid=grid,
            in_specs=[
                pl.BlockSpec((tr, dp), lambda t: (t, 0)),            # lhs_i tile
                pl.BlockSpec((tr, dp), lambda t: (t, 0)),            # lhs_j tile
                pl.BlockSpec(memory_space=pltpu.MemorySpace.VMEM),   # rhs_i^T resident
                pl.BlockSpec(memory_space=pltpu.MemorySpace.VMEM),   # rhs_j^T resident
            ],
            out_specs=pl.BlockSpec((tr, 2), lambda t: (t, 0)),
        ),
        compiler_params=pltpu.CompilerParams(
            # Disjoint output blocks per step -> safe to shard across cores.
            dimension_semantics=("parallel",),
            vmem_limit_bytes=vmem_limit,
        ),
    )(lhs_i, lhs_j, rhs_i_t, rhs_j_t)

    # ---- O(N) epilogue in plain XLA -----------------------------------------
    n_pad = np_rows - n
    # Kernel row-sums include exp(self) on the diagonal and exp(0)=1 for every
    # zero-padded column (n_pad per view): remove both analytically.
    denom_i = denoms[:n, 0] - jnp.exp(self_i) - 2.0 * n_pad
    denom_j = denoms[:n, 1] - jnp.exp(self_j) - 2.0 * n_pad
    pos_exp = jnp.exp(pos)
    loss_i = -jnp.log(pos_exp / (denom_i + 1e-8) + 1e-8)   # rows [0, N)
    loss_j = -jnp.log(pos_exp / (denom_j + 1e-8) + 1e-8)   # rows [N, 2N)
    return jnp.sum(loss_i + loss_j) / jnp.float32(2 * n)


def nt_xent_loss_ref(emb_i, emb_j, temperature=0.5):
    # Pure-JAX mirror of the PyTorch reference, for verification.
    outputs = jnp.concatenate((emb_i, emb_j), axis=0).astype(jnp.float32)
    n2 = outputs.shape[0]
    n = n2 // 2
    norm = jnp.linalg.norm(outputs, axis=1, keepdims=True)
    outputs_norm = outputs / (norm + 1e-8)
    sim = (1.0 / temperature) * (outputs_norm @ outputs_norm.T)
    sim_exp = jnp.exp(sim) * (1.0 - jnp.eye(n2, dtype=jnp.float32))
    loss_mat = -jnp.log(sim_exp / (jnp.sum(sim_exp, axis=1, keepdims=True) + 1e-8) + 1e-8)
    total = jnp.sum(jnp.diag(loss_mat[0:n, n:]) + jnp.diag(loss_mat[n:, 0:n]))
    return total / n2


if __name__ == "__main__":
    key = jax.random.PRNGKey(0)
    k1, k2, k3, k4 = jax.random.split(key, 4)

    # Case 1: single row tile, default bf16 MXU path.
    N, D = 8, 32
    emb_i = jax.random.normal(k1, (N, D), dtype=jnp.float32)
    emb_j = jax.random.normal(k2, (N, D), dtype=jnp.float32)
    loss = nt_xent_loss_pallas(emb_i, emb_j, temperature=0.5)
    jax.block_until_ready(loss)
    ref = nt_xent_loss_ref(emb_i, emb_j, temperature=0.5)
    assert jnp.allclose(loss, ref, rtol=2e-2, atol=2e-2), (loss, ref)

    # Case 2: multi-tile grid with row/feature padding, exact f32 MXU path.
    N2, D2 = 20, 48
    emb_i2 = jax.random.normal(k3, (N2, D2), dtype=jnp.float32)
    emb_j2 = jax.random.normal(k4, (N2, D2), dtype=jnp.float32)
    loss2 = nt_xent_loss_pallas(emb_i2, emb_j2, temperature=0.5, row_tile=8,
                                use_bf16_matmul=False)
    jax.block_until_ready(loss2)
    ref2 = nt_xent_loss_ref(emb_i2, emb_j2, temperature=0.5)
    assert jnp.allclose(loss2, ref2, rtol=1e-4, atol=1e-4), (loss2, ref2)

    # Case 3: same data through the default bf16 path (multi-tile).
    loss3 = nt_xent_loss_pallas(emb_i2, emb_j2, temperature=0.5, row_tile=8)
    jax.block_until_ready(loss3)
    assert jnp.allclose(loss3, ref2, rtol=2e-2, atol=2e-2), (loss3, ref2)

    print("KERNEL_OK")
</pallas_src>

<mosaic_0001>
module attributes {stable_mosaic.version = 11 : i64} {
  func.func @_ntxent_denom_kernel(%arg0: i32, %arg1: memref<8x128xbf16, #tpu.memory_space<vmem>>, %arg2: memref<8x128xbf16, #tpu.memory_space<vmem>>, %arg3: memref<128x8xbf16, #tpu.memory_space<vmem>>, %arg4: memref<128x8xbf16, #tpu.memory_space<vmem>>, %arg5: memref<8x2xf32, #tpu.memory_space<vmem>>) attributes {dimension_semantics = [#tpu.dimension_semantics<parallel>], iteration_bounds = array<i64: 1>, scalar_prefetch = 0 : i64, scratch_operands = 0 : i64, tpu.core_type = #tpu.core_type<tc>, window_params = [{transform_indices = @transform_0, window_bounds = array<i64: 8, 128>}, {transform_indices = @transform_1, window_bounds = array<i64: 8, 128>}, {pipeline_mode = #tpu.pipeline_mode<synchronous>, transform_indices = @transform_2, window_bounds = array<i64: 128, 8>}, {pipeline_mode = #tpu.pipeline_mode<synchronous>, transform_indices = @transform_3, window_bounds = array<i64: 128, 8>}, {transform_indices = @transform_4, window_bounds = array<i64: 8, 2>}]} {
    %c0 = arith.constant 0 : index
    %c0_0 = arith.constant 0 : index
    %0 = vector.load %arg1[%c0, %c0_0] : memref<8x128xbf16, #tpu.memory_space<vmem>>, vector<8x128xbf16>
    %c0_1 = arith.constant 0 : index
    %c0_2 = arith.constant 0 : index
    %1 = vector.load %arg2[%c0_1, %c0_2] : memref<8x128xbf16, #tpu.memory_space<vmem>>, vector<8x128xbf16>
    %c0_3 = arith.constant 0 : index
    %c0_4 = arith.constant 0 : index
    %2 = vector.load %arg3[%c0_3, %c0_4] : memref<128x8xbf16, #tpu.memory_space<vmem>>, vector<128x8xbf16>
    %cst = arith.constant dense<0.000000e+00> : vector<8x8xf32>
    %3 = tpu.matmul %0, %2, %cst {dimension_numbers = #tpu.dot_dimension_numbers<[1], [0], [0], [1], [0, 0, 1, 1], [], []>} : vector<8x128xbf16>, vector<128x8xbf16>, vector<8x8xf32> -> vector<8x8xf32>
    %4 = math.exp %3 : vector<8x8xf32>
    %cst_5 = arith.constant dense<0.000000e+00> : vector<8xf32>
    %5 = vector.multi_reduction <add>, %4, %cst_5 [1] : vector<8x8xf32> to vector<8xf32>
    %6 = vector.shape_cast %5 : vector<8xf32> to vector<8x1xf32>
    %c0_6 = arith.constant 0 : index
    %c0_7 = arith.constant 0 : index
    %7 = vector.load %arg4[%c0_6, %c0_7] : memref<128x8xbf16, #tpu.memory_space<vmem>>, vector<128x8xbf16>
    %cst_8 = arith.constant dense<0.000000e+00> : vector<8x8xf32>
    %8 = tpu.matmul %0, %7, %cst_8 {dimension_numbers = #tpu.dot_dimension_numbers<[1], [0], [0], [1], [0, 0, 1, 1], [], []>} : vector<8x128xbf16>, vector<128x8xbf16>, vector<8x8xf32> -> vector<8x8xf32>
    %9 = math.exp %8 : vector<8x8xf32>
    %cst_9 = arith.constant dense<0.000000e+00> : vector<8xf32>
    %10 = vector.multi_reduction <add>, %9, %cst_9 [1] : vector<8x8xf32> to vector<8xf32>
    %11 = vector.shape_cast %10 : vector<8xf32> to vector<8x1xf32>
    %12 = arith.addf %6, %11 : vector<8x1xf32>
    %c0_10 = arith.constant 0 : index
    %c0_11 = arith.constant 0 : index
    %13 = vector.load %arg3[%c0_10, %c0_11] : memref<128x8xbf16, #tpu.memory_space<vmem>>, vector<128x8xbf16>
    %cst_12 = arith.constant dense<0.000000e+00> : vector<8x8xf32>
    %14 = tpu.matmul %1, %13, %cst_12 {dimension_numbers = #tpu.dot_dimension_numbers<[1], [0], [0], [1], [0, 0, 1, 1], [], []>} : vector<8x128xbf16>, vector<128x8xbf16>, vector<8x8xf32> -> vector<8x8xf32>
    %15 = math.exp %14 : vector<8x8xf32>
    %cst_13 = arith.constant dense<0.000000e+00> : vector<8xf32>
    %16 = vector.multi_reduction <add>, %15, %cst_13 [1] : vector<8x8xf32> to vector<8xf32>
    %17 = vector.shape_cast %16 : vector<8xf32> to vector<8x1xf32>
    %c0_14 = arith.constant 0 : index
    %c0_15 = arith.constant 0 : index
    %18 = vector.load %arg4[%c0_14, %c0_15] : memref<128x8xbf16, #tpu.memory_space<vmem>>, vector<128x8xbf16>
    %cst_16 = arith.constant dense<0.000000e+00> : vector<8x8xf32>
    %19 = tpu.matmul %1, %18, %cst_16 {dimension_numbers = #tpu.dot_dimension_numbers<[1], [0], [0], [1], [0, 0, 1, 1], [], []>} : vector<8x128xbf16>, vector<128x8xbf16>, vector<8x8xf32> -> vector<8x8xf32>
    %20 = math.exp %19 : vector<8x8xf32>
    %cst_17 = arith.constant dense<0.000000e+00> : vector<8xf32>
    %21 = vector.multi_reduction <add>, %20, %cst_17 [1] : vector<8x8xf32> to vector<8xf32>
    %22 = vector.shape_cast %21 : vector<8xf32> to vector<8x1xf32>
    %23 = arith.addf %17, %22 : vector<8x1xf32>
    %24 = tpu.concatenate %12, %23 in 1 : vector<8x1xf32>, vector<8x1xf32> -> vector<8x2xf32>
    %c0_18 = arith.constant 0 : index
    %c0_19 = arith.constant 0 : index
    %25 = vector.load %arg5[%c0_18, %c0_19] : memref<8x2xf32, #tpu.memory_space<vmem>>, vector<8x2xf32>
    tpu.vector_store %arg5[%c0_18, %c0_19], %24 {strides = array<i32>} : memref<8x2xf32, #tpu.memory_space<vmem>>, vector<8x2xf32>,
    return
  }
  func.func @transform_0(%arg0: i32) -> (i32, i32) {
    %c0_i32 = arith.constant 0 : i32
    %c0_i32_0 = arith.constant 0 : i32
    return %arg0, %c0_i32 : i32, i32
  }
  func.func @transform_1(%arg0: i32) -> (i32, i32) {
    %c0_i32 = arith.constant 0 : i32
    %c0_i32_0 = arith.constant 0 : i32
    return %arg0, %c0_i32 : i32, i32
  }
  func.func @transform_2(%arg0: i32) -> (i32, i32) {
    %c0_i32 = arith.constant 0 : i32
    %c0_i32_0 = arith.constant 0 : i32
    %c0_i32_1 = arith.constant 0 : i32
    return %c0_i32, %c0_i32_0 : i32, i32
  }
  func.func @transform_3(%arg0: i32) -> (i32, i32) {
    %c0_i32 = arith.constant 0 : i32
    %c0_i32_0 = arith.constant 0 : i32
    %c0_i32_1 = arith.constant 0 : i32
    return %c0_i32, %c0_i32_0 : i32, i32
  }
  func.func @transform_4(%arg0: i32) -> (i32, i32) {
    %c0_i32 = arith.constant 0 : i32
    %c0_i32_0 = arith.constant 0 : i32
    return %arg0, %c0_i32 : i32, i32
  }
}

</mosaic_0001>

<llo_original>
// kernel: tpu_custom_call.1
$region0: #{tpu_custom_call.1}
  #allocation0 [shape = 'u32[]', space=smem, size = 0x4, offset = 0x4, fixed_abs, tag = 'smem constant byte address 0x4 - core index']
  #allocation1 [shape = 'u32[144,128]{1,0:T(1,128)}', space=vmem, size = 0x12000, scoped, tag = 'internal scratch']
  %s0 = inlined_call_operand.vmem [shape: bf16[8,128], index: 0, kind: input, shape index: {}]
  %s1 = inlined_call_operand.vmem [shape: bf16[8,128], index: 1, kind: input, shape index: {}]
  %s2 = inlined_call_operand.vmem [shape: bf16[128,8], index: 2, kind: input, shape index: {}]
  %s3 = inlined_call_operand.vmem [shape: bf16[128,8], index: 3, kind: input, shape index: {}]
  %s4 = inlined_call_operand.vmem [shape: f32[8,2], index: 4, kind: output, shape index: {}]
  %s5 = sld [smem:[#allocation0]]
  $region26: #{tpu_custom_call.1} parent=0
    _
  %s7 = ssub.s32 1, %s5
  %s8 = scalar_select 0, %s7, %s5
  // Predicated region
  $region2: #{tpu_custom_call.1} parent=0 // pred_check
    _
  $region3: #{tpu_custom_call.1} parent=0 // pred_check_branch
    %10 = sbr.rel (0) target = $region5
  $region4: #{tpu_custom_call.1} parent=0 // pred_region
    _
  $region5: #{tpu_custom_call.1} parent=0 // pred_fallthru
    _
  // Predicated region
  $region6: #{tpu_custom_call.1} parent=0 // pred_check
    _
  $region7: #{tpu_custom_call.1} parent=0 // pred_check_branch
    %12 = sbr.rel (0) target = $region9
  $region8: #{tpu_custom_call.1} parent=0 // pred_region
    _
  $region9: #{tpu_custom_call.1} parent=0 // pred_fallthru
    _
  // Predicated region
  $region10: #{tpu_custom_call.1} parent=0 // pred_check
    _
  $region11: #{tpu_custom_call.1} parent=0 // pred_check_branch
    %14 = sbr.rel (0) target = $region13
  $region12: #{tpu_custom_call.1} parent=0 // pred_region
    _
  $region13: #{tpu_custom_call.1} parent=0 // pred_fallthru
    _
  // Predicated region
  $region14: #{tpu_custom_call.1} parent=0 // pred_check
    _
  $region15: #{tpu_custom_call.1} parent=0 // pred_check_branch
    %16 = sbr.rel (0) target = $region17
  $region16: #{tpu_custom_call.1} parent=0 // pred_region
    _
  $region17: #{tpu_custom_call.1} parent=0 // pred_fallthru
    _
  %v18 = vld [vmem:[%s0] sm:$0xf]
  %v19 = vld [vmem:[%s1] sm:$0xf]
  %v20 = vld [vmem:[%s2] sm:$0xf]
  %v21 = vld [vmem:[%s2 + $0x4] sm:$0xf]
  %v22 = vld [vmem:[%s2 + $0x8] sm:$0xf]
  %v23 = vld [vmem:[%s2 + $0xc] sm:$0xf]
  %v24 = vld [vmem:[%s2 + $0x10] sm:$0xf]
  %v25 = vld [vmem:[%s2 + $0x14] sm:$0xf]
  %v26 = vld [vmem:[%s2 + $0x18] sm:$0xf]
  %v27 = vld [vmem:[%s2 + $0x1c] sm:$0xf]
  %v28 = vld [vmem:[%s2 + $0x20] sm:$0xf]
  %v29 = vld [vmem:[%s2 + $0x24] sm:$0xf]
  %v30 = vld [vmem:[%s2 + $0x28] sm:$0xf]
  %v31 = vld [vmem:[%s2 + $0x2c] sm:$0xf]
  %v32 = vld [vmem:[%s2 + $0x30] sm:$0xf]
  %v33 = vld [vmem:[%s2 + $0x34] sm:$0xf]
  %v34 = vld [vmem:[%s2 + $0x38] sm:$0xf]
  %v35 = vld [vmem:[%s2 + $0x3c] sm:$0xf]
  %v52 = vunpack.c.l.b16 %v20
  %v53 = vunpack.c.l.b16 %v21
  %v54 = vunpack.c.l.b16 %v22
  %v55 = vunpack.c.l.b16 %v23
  %v56 = vunpack.c.l.b16 %v24
  %v57 = vunpack.c.l.b16 %v25
  %v58 = vunpack.c.l.b16 %v26
  %v59 = vunpack.c.l.b16 %v27
  %v60 = vunpack.c.l.b16 %v28
  %v61 = vunpack.c.l.b16 %v29
  %v62 = vunpack.c.l.b16 %v30
  %v63 = vunpack.c.l.b16 %v31
  %v64 = vunpack.c.l.b16 %v32
  %v65 = vunpack.c.l.b16 %v33
  %v66 = vunpack.c.l.b16 %v34
  %v67 = vunpack.c.l.b16 %v35
  %v68 = vpack.c.b16 %v53, %v52
  %v69 = vpack.c.b16 %v55, %v54
  %v70 = vpack.c.b16 %v57, %v56
  %v71 = vpack.c.b16 %v59, %v58
  %v72 = vpack.c.b16 %v61, %v60
  %v73 = vpack.c.b16 %v63, %v62
  %v74 = vpack.c.b16 %v65, %v64
  %v75 = vpack.c.b16 %v67, %v66
  %84 = vmatprep.subr.bf16.mxu0 0
  %85 = vmatpush1.bf16.msra.mxu0 %v75
  %86 = vmatprep.subr.bf16.mxu0 0
  %87 = vmatpush1.bf16.msra.mxu0 %v74
  %88 = vmatprep.subr.bf16.mxu0 0
  %89 = vmatpush1.bf16.msra.mxu0 %v73
  %90 = vmatprep.subr.bf16.mxu0 0
  %91 = vmatpush1.bf16.msra.mxu0 %v72
  %92 = vmatprep.subr.bf16.mxu0 0
  %93 = vmatpush1.bf16.msra.mxu0 %v71
  %94 = vmatprep.subr.bf16.mxu0 0
  %95 = vmatpush1.bf16.msra.mxu0 %v70
  %96 = vmatprep.subr.bf16.mxu0 0
  %97 = vmatpush1.bf16.msra.mxu0 %v69
  %98 = vmatprep.subr.bf16.mxu0 0
  %99 = vmatpush1.bf16.msra.mxu0 %v68
  %100 = vmatprep.subr.bf16.mxu0 0
  %101 = vmatpush2.bf16.msra.mxu0 0
  %102 = vmatprep.subr.bf16.mxu0 0
  %103 = vmatpush2.bf16.msra.mxu0 0
  %104 = vmatprep.subr.bf16.mxu0 0
  %105 = vmatpush2.bf16.msra.mxu0 0
  %106 = vmatprep.subr.bf16.mxu0 0
  %107 = vmatpush2.bf16.msra.mxu0 0
  %108 = vmatprep.subr.bf16.mxu0 0
  %109 = vmatpush2.bf16.msra.mxu0 0
  %110 = vmatprep.subr.bf16.mxu0 0
  %111 = vmatpush2.bf16.msra.mxu0 0
  %112 = vmatprep.subr.bf16.mxu0 0
  %113 = vmatpush2.bf16.msra.mxu0 0
  %114 = vmatprep.subr.bf16.mxu0 0
  %115 = vmatpush2.bf16.msra.mxu0 0
  %116 = vmatprep.mubr.bf16.mxu0 0
  %117 = vmatmul.mubr.bf16.gmra.mxu0 %v18
  %v118 = vpop.f32.mrf.mxu0
  %v119 = vadd.f32 0.0, %v118
  %v120 = vpop.f32.mrf.mxu0
  %v121 = vpop.f32.mrf.mxu0
  %v122 = vpop.f32.mrf.mxu0
  %123 = vdwg.mxu0
  %v124 = vmul.f32 %v119, 1.442695
  %v125 = vpow.pop %v124
  %vm126 = vcmask 64512
  %v127 = vsel %vm126, %v125, 0.0
  %128 = vadd.xlane.f32.xlu0 %v127
  %v129 = vpop.xlane.xlu0 %128
  %v130 = vld [vmem:[%s3] sm:$0xf]
  %v131 = vld [vmem:[%s3 + $0x4] sm:$0xf]
  %v132 = vld [vmem:[%s3 + $0x8] sm:$0xf]
  %v133 = vld [vmem:[%s3 + $0xc] sm:$0xf]
  %v134 = vld [vmem:[%s3 + $0x10] sm:$0xf]
  %v135 = vld [vmem:[%s3 + $0x14] sm:$0xf]
  %v136 = vld [vmem:[%s3 + $0x18] sm:$0xf]
  %v137 = vld [vmem:[%s3 + $0x1c] sm:$0xf]
  %v138 = vld [vmem:[%s3 + $0x20] sm:$0xf]
  %v139 = vld [vmem:[%s3 + $0x24] sm:$0xf]
  %v140 = vld [vmem:[%s3 + $0x28] sm:$0xf]
  %v141 = vld [vmem:[%s3 + $0x2c] sm:$0xf]
  %v142 = vld [vmem:[%s3 + $0x30] sm:$0xf]
  %v143 = vld [vmem:[%s3 + $0x34] sm:$0xf]
  %v144 = vld [vmem:[%s3 + $0x38] sm:$0xf]
  %v145 = vld [vmem:[%s3 + $0x3c] sm:$0xf]
  %v162 = vunpack.c.l.b16 %v130
  %v163 = vunpack.c.l.b16 %v131
  %v164 = vunpack.c.l.b16 %v132
  %v165 = vunpack.c.l.b16 %v133
  %v166 = vunpack.c.l.b16 %v134
  %v167 = vunpack.c.l.b16 %v135
  %v168 = vunpack.c.l.b16 %v136
  %v169 = vunpack.c.l.b16 %v137
  %v170 = vunpack.c.l.b16 %v138
  %v171 = vunpack.c.l.b16 %v139
  %v172 = vunpack.c.l.b16 %v140
  %v173 = vunpack.c.l.b16 %v141
  %v174 = vunpack.c.l.b16 %v142
  %v175 = vunpack.c.l.b16 %v143
  %v176 = vunpack.c.l.b16 %v144
  %v177 = vunpack.c.l.b16 %v145
  %v178 = vpack.c.b16 %v163, %v162
  %v179 = vpack.c.b16 %v165, %v164
  %v180 = vpack.c.b16 %v167, %v166
  %v181 = vpack.c.b16 %v169, %v168
  %v182 = vpack.c.b16 %v171, %v170
  %v183 = vpack.c.b16 %v173, %v172
  %v184 = vpack.c.b16 %v175, %v174
  %v185 = vpack.c.b16 %v177, %v176
  %194 = vmatprep.subr.bf16.mxu0 0
  %195 = vmatpush1.bf16.msra.mxu0 %v185
  %196 = vmatprep.subr.bf16.mxu0 0
  %197 = vmatpush1.bf16.msra.mxu0 %v184
  %198 = vmatprep.subr.bf16.mxu0 0
  %199 = vmatpush1.bf16.msra.mxu0 %v183
  %200 = vmatprep.subr.bf16.mxu0 0
  %201 = vmatpush1.bf16.msra.mxu0 %v182
  %202 = vmatprep.subr.bf16.mxu0 0
  %203 = vmatpush1.bf16.msra.mxu0 %v181
  %204 = vmatprep.subr.bf16.mxu0 0
  %205 = vmatpush1.bf16.msra.mxu0 %v180
  %206 = vmatprep.subr.bf16.mxu0 0
  %207 = vmatpush1.bf16.msra.mxu0 %v179
  %208 = vmatprep.subr.bf16.mxu0 0
  %209 = vmatpush1.bf16.msra.mxu0 %v178
  %210 = vmatprep.subr.bf16.mxu0 0
  %211 = vmatpush2.bf16.msra.mxu0 0
  %212 = vmatprep.subr.bf16.mxu0 0
  %213 = vmatpush2.bf16.msra.mxu0 0
  %214 = vmatprep.subr.bf16.mxu0 0
  %215 = vmatpush2.bf16.msra.mxu0 0
  %216 = vmatprep.subr.bf16.mxu0 0
  %217 = vmatpush2.bf16.msra.mxu0 0
  %218 = vmatprep.subr.bf16.mxu0 0
  %219 = vmatpush2.bf16.msra.mxu0 0
  %220 = vmatprep.subr.bf16.mxu0 0
  %221 = vmatpush2.bf16.msra.mxu0 0
  %222 = vmatprep.subr.bf16.mxu0 0
  %223 = vmatpush2.bf16.msra.mxu0 0
  %224 = vmatprep.subr.bf16.mxu0 0
  %225 = vmatpush2.bf16.msra.mxu0 0
  %226 = vmatprep.mubr.bf16.mxu0 0
  %227 = vmatmul.mubr.bf16.gmra.mxu0 %v18
  %v228 = vpop.f32.mrf.mxu0
  %v229 = vadd.f32 0.0, %v228
  %v230 = vpop.f32.mrf.mxu0
  %v231 = vpop.f32.mrf.mxu0
  %v232 = vpop.f32.mrf.mxu0
  %233 = vdwg.mxu0
  %v234 = vmul.f32 %v229, 1.442695
  %v235 = vpow.pop %v234
  %v236 = vsel %vm126, %v235, 0.0
  %237 = vadd.xlane.f32.xlu0 %v236
  %v238 = vpop.xlane.xlu0 %237
  %v239 = vadd.f32 %v129, %v238
  %240 = vmatprep.subr.bf16.mxu0 0
  %241 = vmatpush1.bf16.msra.mxu0 %v75
  %242 = vmatprep.subr.bf16.mxu0 0
  %243 = vmatpush1.bf16.msra.mxu0 %v74
  %244 = vmatprep.subr.bf16.mxu0 0
  %245 = vmatpush1.bf16.msra.mxu0 %v73
  %246 = vmatprep.subr.bf16.mxu0 0
  %247 = vmatpush1.bf16.msra.mxu0 %v72
  %248 = vmatprep.subr.bf16.mxu0 0
  %249 = vmatpush1.bf16.msra.mxu0 %v71
  %250 = vmatprep.subr.bf16.mxu0 0
  %251 = vmatpush1.bf16.msra.mxu0 %v70
  %252 = vmatprep.subr.bf16.mxu0 0
  %253 = vmatpush1.bf16.msra.mxu0 %v69
  %254 = vmatprep.subr.bf16.mxu0 0
  %255 = vmatpush1.bf16.msra.mxu0 %v68
  %256 = vmatprep.subr.bf16.mxu0 0
  %257 = vmatpush2.bf16.msra.mxu0 0
  %258 = vmatprep.subr.bf16.mxu0 0
  %259 = vmatpush2.bf16.msra.mxu0 0
  %260 = vmatprep.subr.bf16.mxu0 0
  %261 = vmatpush2.bf16.msra.mxu0 0
  %262 = vmatprep.subr.bf16.mxu0 0
  %263 = vmatpush2.bf16.msra.mxu0 0
  %264 = vmatprep.subr.bf16.mxu0 0
  %265 = vmatpush2.bf16.msra.mxu0 0
  %266 = vmatprep.subr.bf16.mxu0 0
  %267 = vmatpush2.bf16.msra.mxu0 0
  %268 = vmatprep.subr.bf16.mxu0 0
  %269 = vmatpush2.bf16.msra.mxu0 0
  %270 = vmatprep.subr.bf16.mxu0 0
  %271 = vmatpush2.bf16.msra.mxu0 0
  %272 = vmatprep.mubr.bf16.mxu0 0
  %273 = vmatmul.mubr.bf16.gmra.mxu0 %v19
  %v274 = vpop.f32.mrf.mxu0
  %v275 = vadd.f32 0.0, %v274
  %v276 = vpop.f32.mrf.mxu0
  %v277 = vpop.f32.mrf.mxu0
  %v278 = vpop.f32.mrf.mxu0
  %279 = vdwg.mxu0
  %v280 = vmul.f32 %v275, 1.442695
  %v281 = vpow.pop %v280
  %v282 = vsel %vm126, %v281, 0.0
  %283 = vadd.xlane.f32.xlu0 %v282
  %v284 = vpop.xlane.xlu0 %283
  %285 = vmatprep.subr.bf16.mxu0 0
  %286 = vmatpush1.bf16.msra.mxu0 %v185
  %287 = vmatprep.subr.bf16.mxu0 0
  %288 = vmatpush1.bf16.msra.mxu0 %v184
  %289 = vmatprep.subr.bf16.mxu0 0
  %290 = vmatpush1.bf16.msra.mxu0 %v183
  %291 = vmatprep.subr.bf16.mxu0 0
  %292 = vmatpush1.bf16.msra.mxu0 %v182
  %293 = vmatprep.subr.bf16.mxu0 0
  %294 = vmatpush1.bf16.msra.mxu0 %v181
  %295 = vmatprep.subr.bf16.mxu0 0
  %296 = vmatpush1.bf16.msra.mxu0 %v180
  %297 = vmatprep.subr.bf16.mxu0 0
  %298 = vmatpush1.bf16.msra.mxu0 %v179
  %299 = vmatprep.subr.bf16.mxu0 0
  %300 = vmatpush1.bf16.msra.mxu0 %v178
  %301 = vmatprep.subr.bf16.mxu0 0
  %302 = vmatpush2.bf16.msra.mxu0 0
  %303 = vmatprep.subr.bf16.mxu0 0
  %304 = vmatpush2.bf16.msra.mxu0 0
  %305 = vmatprep.subr.bf16.mxu0 0
  %306 = vmatpush2.bf16.msra.mxu0 0
  %307 = vmatprep.subr.bf16.mxu0 0
  %308 = vmatpush2.bf16.msra.mxu0 0
  %309 = vmatprep.subr.bf16.mxu0 0
  %310 = vmatpush2.bf16.msra.mxu0 0
  %311 = vmatprep.subr.bf16.mxu0 0
  %312 = vmatpush2.bf16.msra.mxu0 0
  %313 = vmatprep.subr.bf16.mxu0 0
  %314 = vmatpush2.bf16.msra.mxu0 0
  %315 = vmatprep.subr.bf16.mxu0 0
  %316 = vmatpush2.bf16.msra.mxu0 0
  %317 = vmatprep.mubr.bf16.mxu0 0
  %318 = vmatmul.mubr.bf16.gmra.mxu0 %v19
  %v319 = vpop.f32.mrf.mxu0
  %v320 = vadd.f32 0.0, %v319
  %v321 = vpop.f32.mrf.mxu0
  %v322 = vpop.f32.mrf.mxu0
  %v323 = vpop.f32.mrf.mxu0
  %324 = vdwg.mxu0
  %v325 = vmul.f32 %v320, 1.442695
  %v326 = vpow.pop %v325
  %v327 = vsel %vm126, %v326, 0.0
  %328 = vadd.xlane.f32.xlu0 %v327
  %v329 = vpop.xlane.xlu0 %328
  %v330 = vadd.f32 %v284, %v329
  %vm331 = vcmask 7168
  %v332 = vsel %vm331, %v239, %v330
  %vm333 = vcmask 15360
  %334 = vst.msk [vmem:[%s4] sm:$0xff] %vm333, %v332
  // Predicated region
  $region18: #{tpu_custom_call.1} parent=0 // pred_check
    _
  $region19: #{tpu_custom_call.1} parent=0 // pred_check_branch
    %336 = sbr.rel (0) target = $region21
  $region20: #{tpu_custom_call.1} parent=0 // pred_region
    _
  $region21: #{tpu_custom_call.1} parent=0 // pred_fallthru
    _
  // Predicated region
  $region22: #{tpu_custom_call.1} parent=0 // pred_check
    _
  $region23: #{tpu_custom_call.1} parent=0 // pred_check_branch
    %338 = sbr.rel (0) target = $region25
  $region24: #{tpu_custom_call.1} parent=0 // pred_region
    _
  $region25: #{tpu_custom_call.1} parent=0 // pred_fallthru
    _

</llo_original>
